<compile_context>
chip_gen: v7x
topology: tpu7x:2x2x1
jax: 0.10.0
libtpu: 0.0.40
codegen_flags: <defaults>
</compile_context>

<pallas_src>
import jax
import jax.numpy as jnp
from jax.experimental import pallas as pl
from jax.experimental.pallas import tpu as pltpu


def _choose_tb(B, K, itemsize):
    """Pick a batch-tile size TB (multiple of 8) giving ~2 MiB (TB, K) tiles.

    2 MiB per tile keeps 2 inputs + 1 output, double-buffered, comfortably
    under v5e's 16 MiB default scoped VMEM (and far under v6e/v7x budgets).
    """
    target_bytes = 2 * 1024 * 1024
    tb = target_bytes // max(1, K * itemsize)
    tb = int(tb) // 8 * 8
    tb = max(8, min(tb, 1024))
    b_pad = ((B + 7) // 8) * 8  # no point in a tile larger than padded B
    return min(tb, b_pad)


def _mrl_none_kernel(minimum_margin):
    mm = float(minimum_margin)

    def kernel(pos_ref, negs_ref, out_ref):
        # (TB, K) - (TB, 1) broadcast, hinge at 0.  Compute in f32, write back
        # in the native output dtype.  Pallas masks writeback of padded rows.
        margin = negs_ref[...].astype(jnp.float32) - pos_ref[...].astype(jnp.float32)
        out_ref[...] = jnp.maximum(margin + mm, 0.0).astype(out_ref.dtype)

    return kernel


def _mrl_mean_kernel(minimum_margin, B, TB):
    mm = float(minimum_margin)

    def kernel(pos_ref, negs_ref, psum_ref):
        i = pl.program_id(0)
        margin = negs_ref[...].astype(jnp.float32) - pos_ref[...].astype(jnp.float32)
        loss = jnp.maximum(margin + mm, 0.0)
        # Mask rows beyond B (padded reads of the ragged last block are
        # unspecified and must not enter the sum).
        row = jax.lax.broadcasted_iota(jnp.int32, loss.shape, 0) + i * TB
        loss = jnp.where(row < B, loss, 0.0)
        partial = jnp.sum(loss)  # f32 partial sum for this block
        # Lane-dense (1, 128) write: same partial in every lane; host reads
        # lane 0.  Keeps the store unmasked and the grid axis fully parallel.
        psum_ref[...] = jnp.full(psum_ref.shape, partial, dtype=jnp.float32)

    return kernel


def margin_ranking_loss(pos_scores, negs_scores, reduction="mean",
                        minimum_margin=1.0, block_b=None):
    """Pallas implementation of MarginRankingLoss.forward.

    pos_scores:  (B,)   float
    negs_scores: (B, K) float
    returns: scalar f32 (reduction='mean') or (B, K) in input dtype ('none')
    """
    if reduction not in ("mean", "none"):
        raise ValueError(f"Unknown reduction method: {reduction}")

    B, K = negs_scores.shape
    pos2d = pos_scores.reshape(B, 1)  # no dtype cast in the wrapper

    itemsize = jnp.dtype(negs_scores.dtype).itemsize
    TB = block_b if block_b is not None else _choose_tb(B, K, itemsize)
    assert TB % 8 == 0, "batch tile must be a multiple of 8 sublanes"
    grid = (pl.cdiv(B, TB),)

    in_specs = [
        pl.BlockSpec((TB, 1), lambda i: (i, 0)),
        pl.BlockSpec((TB, K), lambda i: (i, 0)),
    ]
    cparams = pltpu.CompilerParams(dimension_semantics=("parallel",))

    if reduction == "none":
        # TODO(synk): for K not a multiple of 128 the (B, K) output store is
        # lane-masked; a lane-dense repack (B*K viewed as (*, 128)) would need
        # a pre-broadcast of pos and extra HBM traffic, so it is skipped here.
        return pl.pallas_call(
            _mrl_none_kernel(minimum_margin),
            out_shape=jax.ShapeDtypeStruct((B, K), negs_scores.dtype),
            grid=grid,
            in_specs=in_specs,
            out_specs=pl.BlockSpec((TB, K), lambda i: (i, 0)),
            compiler_params=cparams,
        )(pos2d, negs_scores)

    # reduction == 'mean': per-block partial sums, finished in JAX.
    nb = grid[0]
    partials = pl.pallas_call(
        _mrl_mean_kernel(minimum_margin, B, TB),
        out_shape=jax.ShapeDtypeStruct((nb, 128), jnp.float32),
        grid=grid,
        in_specs=in_specs,
        out_specs=pl.BlockSpec((1, 128), lambda i: (i, 0)),
        compiler_params=cparams,
    )(pos2d, negs_scores)
    return partials[:, 0].sum() / jnp.float32(B * K)


def _reference(pos_scores, negs_scores, reduction, minimum_margin):
    loss = jnp.maximum(
        negs_scores.astype(jnp.float32) - pos_scores.astype(jnp.float32)[:, None]
        + minimum_margin, 0.0)
    if reduction == "mean":
        return loss.mean()
    return loss.astype(negs_scores.dtype)


if __name__ == "__main__":
    key = jax.random.PRNGKey(0)
    k1, k2, k3, k4 = jax.random.split(key, 4)

    # --- small case matching the module's typical use: batch=8, k=16 negatives
    B, K = 8, 16
    pos_scores = jax.random.normal(k1, (B,), dtype=jnp.float32)
    negs_scores = jax.random.normal(k2, (B, K), dtype=jnp.float32)

    loss_mean = margin_ranking_loss(pos_scores, negs_scores, reduction="mean",
                                    minimum_margin=1.0)
    loss_mean = jax.block_until_ready(loss_mean)
    loss_none = margin_ranking_loss(pos_scores, negs_scores, reduction="none",
                                    minimum_margin=1.0)
    loss_none = jax.block_until_ready(loss_none)

    ref_none = _reference(pos_scores, negs_scores, "none", 1.0)
    ref_mean = _reference(pos_scores, negs_scores, "mean", 1.0)
    assert jnp.allclose(loss_none, ref_none, atol=1e-6), "none-reduction mismatch"
    assert jnp.allclose(loss_mean, ref_mean, atol=1e-6), "mean-reduction mismatch"

    # --- ragged / multi-block case: exercises tiling, parallel grid and
    #     padded-row masking (B not a multiple of the batch tile).
    B2, K2 = 300, 96
    pos2 = jax.random.normal(k3, (B2,), dtype=jnp.float32)
    negs2 = jax.random.normal(k4, (B2, K2), dtype=jnp.float32)

    loss2_mean = margin_ranking_loss(pos2, negs2, reduction="mean",
                                     minimum_margin=1.0, block_b=64)
    loss2_mean = jax.block_until_ready(loss2_mean)
    loss2_none = margin_ranking_loss(pos2, negs2, reduction="none",
                                     minimum_margin=1.0, block_b=64)
    loss2_none = jax.block_until_ready(loss2_none)

    ref2_none = _reference(pos2, negs2, "none", 1.0)
    ref2_mean = _reference(pos2, negs2, "mean", 1.0)
    assert jnp.allclose(loss2_none, ref2_none, atol=1e-6), "tiled none mismatch"
    assert jnp.allclose(loss2_mean, ref2_mean, atol=1e-5,
                        rtol=1e-5), "tiled mean mismatch"

    print("KERNEL_OK")
</pallas_src>

<mosaic_0001>
module attributes {stable_mosaic.version = 11 : i64} {
  func.func @kernel(%arg0: i32, %arg1: memref<8x1xf32, #tpu.memory_space<vmem>>, %arg2: memref<8x16xf32, #tpu.memory_space<vmem>>, %arg3: memref<1x128xf32, #tpu.memory_space<vmem>>) attributes {dimension_semantics = [#tpu.dimension_semantics<parallel>], iteration_bounds = array<i64: 1>, scalar_prefetch = 0 : i64, scratch_operands = 0 : i64, tpu.core_type = #tpu.core_type<tc>, window_params = [{transform_indices = @transform_0, window_bounds = array<i64: 8, 1>}, {transform_indices = @transform_1, window_bounds = array<i64: 8, 16>}, {transform_indices = @transform_2, window_bounds = array<i64: 1, 128>}]} {
    %c0 = arith.constant 0 : index
    %c0_0 = arith.constant 0 : index
    %0 = vector.load %arg2[%c0, %c0_0] : memref<8x16xf32, #tpu.memory_space<vmem>>, vector<8x16xf32>
    %c0_1 = arith.constant 0 : index
    %c0_2 = arith.constant 0 : index
    %1 = vector.load %arg1[%c0_1, %c0_2] : memref<8x1xf32, #tpu.memory_space<vmem>>, vector<8x1xf32>
    %2 = vector.broadcast %1 : vector<8x1xf32> to vector<8x16xf32>
    %3 = arith.subf %0, %2 : vector<8x16xf32>
    %cst = arith.constant 1.000000e+00 : f32
    %4 = vector.broadcast %cst : f32 to vector<8x16xf32>
    %5 = arith.addf %3, %4 : vector<8x16xf32>
    %cst_3 = arith.constant 0.000000e+00 : f32
    %6 = vector.broadcast %cst_3 : f32 to vector<8x16xf32>
    %7 = arith.maximumf %5, %6 : vector<8x16xf32>
    %8 = tpu.iota {dimensions = array<i32: 0>} : vector<8x16xi32>
    %c8_i32 = arith.constant 8 : i32
    %9 = arith.muli %arg0, %c8_i32 : i32
    %10 = vector.broadcast %9 : i32 to vector<8x16xi32>
    %11 = arith.addi %8, %10 : vector<8x16xi32>
    %c8_i32_4 = arith.constant 8 : i32
    %12 = vector.broadcast %c8_i32_4 : i32 to vector<8x16xi32>
    %13 = arith.cmpi slt, %11, %12 : vector<8x16xi32>
    %cst_5 = arith.constant 0.000000e+00 : f32
    %14 = vector.broadcast %cst_5 : f32 to vector<8x16xf32>
    %15 = arith.select %13, %7, %14 : vector<8x16xi1>, vector<8x16xf32>
    %16 = vector.shape_cast %15 : vector<8x16xf32> to vector<1x8x16xf32>
    %cst_6 = arith.constant dense<0.000000e+00> : vector<1xf32>
    %17 = vector.multi_reduction <add>, %16, %cst_6 [1, 2] : vector<1x8x16xf32> to vector<1xf32>
    %18 = vector.shape_cast %17 : vector<1xf32> to vector<1x1x1xf32>
    %19 = vector.extract %18[0, 0, 0] : f32 from vector<1x1x1xf32>
    %20 = vector.broadcast %19 : f32 to vector<1x128xf32>
    %c0_7 = arith.constant 0 : index
    %c0_8 = arith.constant 0 : index
    %21 = vector.load %arg3[%c0_7, %c0_8] : memref<1x128xf32, #tpu.memory_space<vmem>>, vector<1x128xf32>
    tpu.vector_store %arg3[%c0_7, %c0_8], %20 {strides = array<i32>} : memref<1x128xf32, #tpu.memory_space<vmem>>, vector<1x128xf32>,
    return
  }
  func.func @transform_0(%arg0: i32) -> (i32, i32) {
    %c0_i32 = arith.constant 0 : i32
    %c0_i32_0 = arith.constant 0 : i32
    return %arg0, %c0_i32 : i32, i32
  }
  func.func @transform_1(%arg0: i32) -> (i32, i32) {
    %c0_i32 = arith.constant 0 : i32
    %c0_i32_0 = arith.constant 0 : i32
    return %arg0, %c0_i32 : i32, i32
  }
  func.func @transform_2(%arg0: i32) -> (i32, i32) {
    %c0_i32 = arith.constant 0 : i32
    %c0_i32_0 = arith.constant 0 : i32
    return %arg0, %c0_i32 : i32, i32
  }
}

</mosaic_0001>

<llo_original>
// kernel: tpu_custom_call.1
$region0: #{tpu_custom_call.1}
  #allocation0 [shape = 'u32[]', space=smem, size = 0x4, offset = 0x4, fixed_abs, tag = 'smem constant byte address 0x4 - core index']
  #allocation1 [shape = 'u32[144,128]{1,0:T(1,128)}', space=vmem, size = 0x12000, scoped, tag = 'internal scratch']
  %s0 = inlined_call_operand.vmem [shape: f32[8,1], index: 0, kind: input, shape index: {}]
  %s1 = inlined_call_operand.vmem [shape: f32[8,16], index: 1, kind: input, shape index: {}]
  %s2 = inlined_call_operand.hbm [shape: f32[1,128], index: 2, kind: output, shape index: {}]
  %s3 = sld [smem:[#allocation0]]
  $region18: #{tpu_custom_call.1} parent=0
    _
  %s5 = ssub.s32 1, %s3
  %s6 = scalar_select 0, %s5, %s3
  $region1: #{tpu_custom_call.1} parent=0
    #allocation2 [shape = 'u8[512]{0}', space=vmem, size = 0x400, scoped, tag = 'output window, operand 0, single buffered']
    #allocation3 [shape = 's32[1]{0}', space=sflag, size = 0x4, scoped, tag = 'scoped memory for tpu_custom_call.1']
    %7 = vsyncpa [#allocation3], 0
    // Predicated region
    $region2: #{tpu_custom_call.1} parent=1 // pred_check
      _
    $region3: #{tpu_custom_call.1} parent=1 // pred_check_branch
      %9 = sbr.rel (0) target = $region5
    $region4: #{tpu_custom_call.1} parent=1 // pred_region
      _
    $region5: #{tpu_custom_call.1} parent=1 // pred_fallthru
      _
    // Predicated region
    $region6: #{tpu_custom_call.1} parent=1 // pred_check
      _
    $region7: #{tpu_custom_call.1} parent=1 // pred_check_branch
      %11 = sbr.rel (0) target = $region9
    $region8: #{tpu_custom_call.1} parent=1 // pred_region
      _
    $region9: #{tpu_custom_call.1} parent=1 // pred_fallthru
      _
    %v12 = vld [vmem:[%s1] sm:$0xff]
    %v13 = vld [vmem:[%s0] sm:$0xff]
    %15 = vset.pattern.permute.xlu0 0
    %16 = vperm.xlu0 %15, %v13
    %v17 = vpop.permute.xlu0 %16
    %v19 = vsub.f32 %v12, %v17
    %v20 = vadd.f32 %v19, 1.0
    %v21 = vmax.f32 %v20, 0.0
    %v22 = vlaneseq
    %v23 = vshrl.u32 %v22, 7
    %s24 = smul.u32 0, 8
    %v25 = vstv %s24
    %v26 = vadd.s32 %v23, %v25
    %vm27 = vcmp.lt.s32.totalorder %v26, 8
    %v28 = vsel %vm27, %v21, 0.0
    %vm29 = vcmask 130048
    %v30 = vsel %vm29, %v28, 0.0
    %31 = vadd.xlane.f32.xlu0 %v30
    %v32 = vpop.xlane.xlu0 %31
    %v33 = vrot.slane %v32, 4
    %v34 = vadd.f32 %v32, %v33
    %v35 = vrot.slane %v34, 2
    %v36 = vadd.f32 %v34, %v35
    %v37 = vrot.slane %v36, 1
    %v38 = vadd.f32 %v36, %v37
    %s39 = vtos %v38
    %v40 = vstv %s39
    %41 = vst [vmem:[#allocation2] sm:$0x1] %v40
    // Predicated region
    $region10: #{tpu_custom_call.1} parent=1 // pred_check
      _
    $region11: #{tpu_custom_call.1} parent=1 // pred_check_branch
      %43 = sbr.rel (0) target = $region13
    $region12: #{tpu_custom_call.1} parent=1 // pred_region
      %s45 = ssub.s32 16, 16
      %46 = vsyncadd [#allocation3], %s45
      %s48 = sshll.u32 [#allocation2], 4
      %s49 = int_to_ptr.vmem [resolvable:$true] %s48
      %51 = dma.vmem_to_hbm [thread:$0]  %s49, 16, %s2, [#allocation3]
    $region13: #{tpu_custom_call.1} parent=1 // pred_fallthru
      _
    // Predicated region
    $region14: #{tpu_custom_call.1} parent=1 // pred_check
      _
    $region15: #{tpu_custom_call.1} parent=1 // pred_check_branch
      %53 = sbr.rel (0) target = $region17
    $region16: #{tpu_custom_call.1} parent=1 // pred_region
      %54 = dma.done [#allocation3], 16
    $region17: #{tpu_custom_call.1} parent=1 // pred_fallthru
      _
    %55 = vsyncpa [#allocation3], 1

</llo_original>
